<compile_context>
chip_gen: v6e
topology: v6e:2x2x1
jax: 0.10.0
libtpu: 0.0.40
codegen_flags: <defaults>
</compile_context>

<pallas_src>
import jax
import jax.numpy as jnp
from jax.experimental import pallas as pl
from jax.experimental.pallas import tpu as pltpu


def _h_swish_kernel(x_ref, o_ref):
    x = x_ref[...]
    # h_swish(x) = x * relu6(x + 3) / 6.  Python float constants are
    # weak-typed, so bf16 inputs stay bf16 on the VPU (no upcast traffic).
    o_ref[...] = (x * jnp.clip(x + 3.0, 0.0, 6.0) / 6.0).astype(o_ref.dtype)


_LANE = 128
_MAX_COLS = 4096                         # lane-dense output width cap
_TARGET_BLOCK_BYTES = 2 * 1024 * 1024    # 2 MiB/block; x4 double-buffer = 8 MiB


def _pick_cols(n: int):
    """Largest multiple of 128 (<= 4096) that evenly divides n, else None."""
    top = min(n, _MAX_COLS)
    top -= top % _LANE
    for c in range(top, _LANE - 1, -_LANE):
        if n % c == 0:
            return c
    return None


def h_swish(x: jax.Array) -> jax.Array:
    """Elementwise hard-swish; accepts any shape, matches torch semantics."""
    orig_shape = x.shape
    dtype = x.dtype
    n = x.size
    if n == 0:
        return x

    itemsize = jnp.dtype(dtype).itemsize

    cols = _pick_cols(n)
    if cols is None:
        # Fallback for awkward element counts (no multiple of 128 divides n):
        # pad the flat tail; padded zeros give h_swish(0)=0 and are sliced off.
        cols = _LANE
        rows = pl.cdiv(n, cols)
        flat = jnp.pad(x.reshape(-1), (0, rows * cols - n))
        x2d = flat.reshape(rows, cols)
        padded = True
    else:
        rows = n // cols
        x2d = x.reshape(rows, cols)      # contiguous collapse: no pad, no copy
        padded = False

    # Row tile: multiple of 32 sublanes, sized so one block is ~2 MiB.
    budget_rows = max(32, (_TARGET_BLOCK_BYTES // (cols * itemsize)) // 32 * 32)
    if rows <= budget_rows:
        tile_rows = rows                 # single full-extent block
    else:
        tile_rows = budget_rows          # ragged last block is masked by Pallas

    grid = (pl.cdiv(rows, tile_rows),)

    out2d = pl.pallas_call(
        _h_swish_kernel,
        out_shape=jax.ShapeDtypeStruct((rows, cols), dtype),
        grid=grid,
        in_specs=[pl.BlockSpec((tile_rows, cols), lambda i: (i, 0))],
        out_specs=pl.BlockSpec((tile_rows, cols), lambda i: (i, 0)),
        compiler_params=pltpu.CompilerParams(
            dimension_semantics=("parallel",),   # v7x: shard grid over 2 TCs
        ),
    )(x2d)

    if padded:
        return out2d.reshape(-1)[:n].reshape(orig_shape)
    return out2d.reshape(orig_shape)


if __name__ == "__main__":
    key = jax.random.PRNGKey(0)
    x = jax.random.normal(key, (2, 4, 16, 16), dtype=jnp.float32) * 4.0  # NCHW

    out = h_swish(x)
    jax.block_until_ready(out)

    # Reference (pure JAX, same math as torch h_swish = x * relu6(x+3)/6).
    ref = x * jnp.clip(x + 3.0, 0.0, 6.0) / 6.0
    assert out.shape == x.shape and out.dtype == x.dtype
    assert jnp.allclose(out, ref, atol=1e-6, rtol=1e-6)

    print("KERNEL_OK")
</pallas_src>

<mosaic_0001>
module attributes {stable_mosaic.version = 11 : i64} {
  func.func @_h_swish_kernel(%arg0: i32, %arg1: memref<1x2048xf32, #tpu.memory_space<vmem>>, %arg2: memref<1x2048xf32, #tpu.memory_space<vmem>>) attributes {dimension_semantics = [#tpu.dimension_semantics<parallel>], iteration_bounds = array<i64: 1>, scalar_prefetch = 0 : i64, scratch_operands = 0 : i64, tpu.core_type = #tpu.core_type<tc>, window_params = [{transform_indices = @transform_0, window_bounds = array<i64: 1, 2048>}, {transform_indices = @transform_1, window_bounds = array<i64: 1, 2048>}]} {
    %c0 = arith.constant 0 : index
    %c0_0 = arith.constant 0 : index
    %0 = vector.load %arg1[%c0, %c0_0] : memref<1x2048xf32, #tpu.memory_space<vmem>>, vector<1x2048xf32>
    %cst = arith.constant 3.000000e+00 : f32
    %1 = vector.broadcast %cst : f32 to vector<1x2048xf32>
    %2 = arith.addf %0, %1 : vector<1x2048xf32>
    %cst_1 = arith.constant 0.000000e+00 : f32
    %cst_2 = arith.constant 6.000000e+00 : f32
    %3 = vector.broadcast %cst_1 : f32 to vector<1x2048xf32>
    %4 = arith.maximumf %3, %2 : vector<1x2048xf32>
    %5 = vector.broadcast %cst_2 : f32 to vector<1x2048xf32>
    %6 = arith.minimumf %5, %4 : vector<1x2048xf32>
    %7 = arith.mulf %0, %6 : vector<1x2048xf32>
    %cst_3 = arith.constant 6.000000e+00 : f32
    %8 = vector.broadcast %cst_3 : f32 to vector<1x2048xf32>
    %9 = arith.divf %7, %8 : vector<1x2048xf32>
    %c0_4 = arith.constant 0 : index
    %c0_5 = arith.constant 0 : index
    %10 = vector.load %arg2[%c0_4, %c0_5] : memref<1x2048xf32, #tpu.memory_space<vmem>>, vector<1x2048xf32>
    tpu.vector_store %arg2[%c0_4, %c0_5], %9 {strides = array<i32>} : memref<1x2048xf32, #tpu.memory_space<vmem>>, vector<1x2048xf32>,
    return
  }
  func.func @transform_0(%arg0: i32) -> (i32, i32) {
    %c0_i32 = arith.constant 0 : i32
    %c0_i32_0 = arith.constant 0 : i32
    return %arg0, %c0_i32 : i32, i32
  }
  func.func @transform_1(%arg0: i32) -> (i32, i32) {
    %c0_i32 = arith.constant 0 : i32
    %c0_i32_0 = arith.constant 0 : i32
    return %arg0, %c0_i32 : i32, i32
  }
}

</mosaic_0001>

<llo_original>
// kernel: tpu_custom_call.1
$region0: #{tpu_custom_call.1}
  #allocation0 [shape = 'u32[]', space=smem, size = 0x4, offset = 0x4, fixed_abs, tag = 'smem constant byte address 0x4 - core index']
  #allocation1 [shape = 'u32[144,128]{1,0:T(1,128)}', space=vmem, size = 0x12000, scoped, tag = 'internal scratch']
  %s0 = inlined_call_operand.hbm [shape: f32[1,2048], index: 0, kind: input, shape index: {}]
  %s1 = inlined_call_operand.hbm [shape: f32[1,2048], index: 1, kind: output, shape index: {}]
  %s2 = sld [smem:[#allocation0]]
  $region18: #{tpu_custom_call.1} parent=0
    _
  %s4 = ssub.s32 1, %s2
  %s5 = scalar_select 0, %s4, %s2
  $region1: #{tpu_custom_call.1} parent=0
    #allocation2 [shape = 'u8[8192]{0}', space=vmem, size = 0x2000, scoped, tag = 'input window, operand 0, single buffered']
    #allocation3 [shape = 's32[1]{0}', space=sflag, size = 0x4, scoped, tag = 'scoped memory for tpu_custom_call.1']
    #allocation4 [shape = 's32[1]{0}', space=sflag, size = 0x4, scoped, tag = 'scoped memory for tpu_custom_call.1']
    #allocation5 [shape = 'u8[8192]{0}', space=vmem, size = 0x2000, scoped, tag = 'output window, operand 0, single buffered']
    %6 = vsyncpa [#allocation3], 0
    %7 = vsyncpa [#allocation4], 0
    // Predicated region
    $region2: #{tpu_custom_call.1} parent=1 // pred_check
      _
    $region3: #{tpu_custom_call.1} parent=1 // pred_check_branch
      %9 = sbr.rel (0) target = $region5
    $region4: #{tpu_custom_call.1} parent=1 // pred_region
      %s11 = ssub.s32 256, 256
      %12 = vsyncadd [#allocation3], %s11
      %s14 = sshll.u32 [#allocation2], 4
      %s15 = int_to_ptr.vmem [resolvable:$true] %s14
      %17 = dma.hbm_to_vmem [thread:$0]  %s0, 256, %s15, [#allocation3]
    $region5: #{tpu_custom_call.1} parent=1 // pred_fallthru
      _
    // Predicated region
    $region6: #{tpu_custom_call.1} parent=1 // pred_check
      _
    $region7: #{tpu_custom_call.1} parent=1 // pred_check_branch
      %19 = sbr.rel (0) target = $region9
    $region8: #{tpu_custom_call.1} parent=1 // pred_region
      %20 = dma.done [#allocation3], 256
    $region9: #{tpu_custom_call.1} parent=1 // pred_fallthru
      _
    %v21 = vld [vmem:[#allocation2] sm:$0xff]
    %v22 = vld [vmem:[#allocation2 + $0x8] sm:$0xff]
    %v23 = vadd.f32 %v21, 3.0
    %v24 = vadd.f32 %v22, 3.0
    %v25 = vmax.f32 %v23, 0.0
    %v26 = vmax.f32 %v24, 0.0
    %v27 = vmin.f32 %v25, 6.0
    %v28 = vmin.f32 %v26, 6.0
    %v29 = vmul.f32 %v21, %v27
    %v30 = vmul.f32 %v22, %v28
    %v31 = vrcp.pop 6.0
    %v32 = vmul.f32 %v29, %v31
    %v33 = vmul.f32 %v30, %v31
    %34 = vst [vmem:[#allocation5] sm:$0xff] %v32
    %35 = vst [vmem:[#allocation5 + $0x8] sm:$0xff] %v33
    // Predicated region
    $region10: #{tpu_custom_call.1} parent=1 // pred_check
      _
    $region11: #{tpu_custom_call.1} parent=1 // pred_check_branch
      %37 = sbr.rel (0) target = $region13
    $region12: #{tpu_custom_call.1} parent=1 // pred_region
      %s39 = ssub.s32 256, 256
      %40 = vsyncadd [#allocation4], %s39
      %s42 = sshll.u32 [#allocation5], 4
      %s43 = int_to_ptr.vmem [resolvable:$true] %s42
      %45 = dma.vmem_to_hbm [thread:$0]  %s43, 256, %s1, [#allocation4]
    $region13: #{tpu_custom_call.1} parent=1 // pred_fallthru
      _
    // Predicated region
    $region14: #{tpu_custom_call.1} parent=1 // pred_check
      _
    $region15: #{tpu_custom_call.1} parent=1 // pred_check_branch
      %47 = sbr.rel (0) target = $region17
    $region16: #{tpu_custom_call.1} parent=1 // pred_region
      %48 = dma.done [#allocation4], 256
    $region17: #{tpu_custom_call.1} parent=1 // pred_fallthru
      _
    %49 = vsyncpa [#allocation3], 1
    %50 = vsyncpa [#allocation4], 1

</llo_original>
